<compile_context>
chip_gen: v7x
topology: tpu7x:2x2x1
jax: 0.10.0
libtpu: 0.0.40
codegen_flags: <defaults>
</compile_context>

<pallas_src>
import functools

import jax
import jax.numpy as jnp
from jax.experimental import pallas as pl
from jax.experimental.pallas import tpu as pltpu

candidate_Cs = [8, 16, 24, 32, 40, 48, 56, 64]

_BN_EPS = 1e-5


def _fr_kernel(x_ref, w_ref, shift_ref, o_ref):
    """Fused ReLU -> 1x1 conv (channel matmul) -> BN scale/shift for one tile.

    x_ref:     (1, C_in, t_hw)   input tile (one batch element, spatial block)
    w_ref:     (C_out, C_in)     BN-scale-fused conv weight (resident)
    shift_ref: (C_out, 1)        fused bias/BN shift (resident)
    o_ref:     (1, C_out, t_hw)  output tile
    """
    xb = jnp.maximum(x_ref[0], 0).astype(jnp.float32)          # ReLU, (C_in, t_hw)
    acc = jnp.dot(w_ref[...], xb,                               # MXU matmul
                  preferred_element_type=jnp.float32,
                  precision=jax.lax.Precision.HIGHEST)          # (C_out, t_hw)
    o_ref[0] = (acc + shift_ref[...]).astype(o_ref.dtype)


def _pick_spatial_tile(hw, c_in, c_out, dtype_bytes=4, budget_bytes=4 << 20):
    """Largest lane-dense (multiple-of-128) divisor of hw under the VMEM budget."""
    if hw % 128 != 0:
        return hw  # full-extent block is always legal
    best = 128
    t = 128
    while t <= hw:
        if hw % t == 0 and (c_in + c_out) * t * dtype_bytes <= budget_bytes:
            best = t
        t += 128
    return best


@functools.partial(jax.jit, static_argnums=(1, 2))
def factorized_reduce_forward(x, in_idx, out_idx,
                              weight, bias,
                              bn_gamma, bn_beta, bn_mean, bn_var):
    """FactorizedReduce.forward(x, in_idx, out_idx) for stride == 1.

    x:        (N, C_in_active, H, W), NCHW, C_in_active == candidate_Cs[in_idx]
    weight:   (C_max, C_max, 1, 1) slimmable conv weight
    bias:     (C_max,) conv bias or None
    bn_*:     (C_max,) BatchNorm params / running stats (eval mode)
    """
    N, C_in, H, W = x.shape
    assert C_in == candidate_Cs[in_idx], "input channels must match in_idx"
    C_out = candidate_Cs[out_idx]

    # Slimmable slicing (static Python indices -> static slices).
    w = weight[:C_out, :C_in, 0, 0].astype(jnp.float32)          # (C_out, C_in)
    b = (bias[:C_out].astype(jnp.float32) if bias is not None
         else jnp.zeros((C_out,), jnp.float32))
    gamma = bn_gamma[:C_out].astype(jnp.float32)
    beta = bn_beta[:C_out].astype(jnp.float32)
    mean = bn_mean[:C_out].astype(jnp.float32)
    var = bn_var[:C_out].astype(jnp.float32)

    # Fold BN scale into the weight, BN shift + conv bias into one vector.
    scale = gamma * jax.lax.rsqrt(var + _BN_EPS)                 # (C_out,)
    w_fused = w * scale[:, None]                                 # (C_out, C_in)
    shift = (scale * (b - mean) + beta).reshape(C_out, 1)        # (C_out, 1)

    HW = H * W
    x3 = x.reshape(N, C_in, HW)                                  # free reshape
    t_hw = _pick_spatial_tile(HW, C_in, C_out)
    grid = (N, HW // t_hw)

    out3 = pl.pallas_call(
        _fr_kernel,
        out_shape=jax.ShapeDtypeStruct((N, C_out, HW), x.dtype),
        grid_spec=pltpu.PrefetchScalarGridSpec(
            num_scalar_prefetch=0,
            grid=grid,
            in_specs=[
                pl.BlockSpec((1, C_in, t_hw), lambda n, j: (n, 0, j)),
                pl.BlockSpec((C_out, C_in), lambda n, j: (0, 0)),
                pl.BlockSpec((C_out, 1), lambda n, j: (0, 0)),
            ],
            out_specs=pl.BlockSpec((1, C_out, t_hw), lambda n, j: (n, 0, j)),
        ),
        compiler_params=pltpu.CompilerParams(
            dimension_semantics=("parallel", "parallel"),
            vmem_limit_bytes=32 * 1024 * 1024,
        ),
    )(x3, w_fused, shift)

    return out3.reshape(N, C_out, H, W)


if __name__ == "__main__":
    key = jax.random.PRNGKey(0)
    ks = jax.random.split(key, 7)

    C_MAX = max(candidate_Cs)
    in_idx, out_idx = 1, 2                 # C_in = 16, C_out = 24
    C_in = candidate_Cs[in_idx]
    C_out = candidate_Cs[out_idx]
    N, H, W = 2, 16, 16

    x = jax.random.normal(ks[0], (N, C_in, H, W), jnp.float32)
    weight = 0.1 * jax.random.normal(ks[1], (C_MAX, C_MAX, 1, 1), jnp.float32)
    bias = 0.1 * jax.random.normal(ks[2], (C_MAX,), jnp.float32)
    gamma = 1.0 + 0.1 * jax.random.normal(ks[3], (C_MAX,), jnp.float32)
    beta = 0.1 * jax.random.normal(ks[4], (C_MAX,), jnp.float32)
    run_mean = 0.1 * jax.random.normal(ks[5], (C_MAX,), jnp.float32)
    run_var = 0.5 + jax.nn.softplus(jax.random.normal(ks[6], (C_MAX,), jnp.float32))

    y = factorized_reduce_forward(x, in_idx, out_idx,
                                  weight, bias, gamma, beta, run_mean, run_var)
    y = jax.block_until_ready(y)

    # Pure-JAX reference: ReLU -> sliced 1x1 conv -> eval-mode BatchNorm.
    w_ref = weight[:C_out, :C_in, 0, 0]
    xr = jnp.maximum(x, 0.0)
    conv = jnp.einsum("oc,nchw->nohw", w_ref, xr,
                      precision=jax.lax.Precision.HIGHEST)
    conv = conv + bias[:C_out][None, :, None, None]
    inv = gamma[:C_out] / jnp.sqrt(run_var[:C_out] + _BN_EPS)
    ref = (inv[None, :, None, None] * (conv - run_mean[:C_out][None, :, None, None])
           + beta[:C_out][None, :, None, None])

    assert y.shape == (N, C_out, H, W) and y.dtype == x.dtype
    max_err = float(jnp.max(jnp.abs(y - ref)))
    assert bool(jnp.allclose(y, ref, atol=5e-3, rtol=5e-3)), max_err
    print("KERNEL_OK")
</pallas_src>

<mosaic_0001>
module attributes {stable_mosaic.version = 11 : i64} {
  func.func @_fr_kernel(%arg0: i32, %arg1: i32, %arg2: memref<1x16x256xf32, #tpu.memory_space<vmem>>, %arg3: memref<24x16xf32, #tpu.memory_space<vmem>>, %arg4: memref<24x1xf32, #tpu.memory_space<vmem>>, %arg5: memref<1x24x256xf32, #tpu.memory_space<vmem>>) attributes {dimension_semantics = [#tpu.dimension_semantics<parallel>, #tpu.dimension_semantics<parallel>], iteration_bounds = array<i64: 2, 1>, scalar_prefetch = 0 : i64, scratch_operands = 0 : i64, tpu.core_type = #tpu.core_type<tc>, window_params = [{transform_indices = @transform_0, window_bounds = array<i64: 1, 16, 256>}, {pipeline_mode = #tpu.pipeline_mode<synchronous>, transform_indices = @transform_1, window_bounds = array<i64: 24, 16>}, {pipeline_mode = #tpu.pipeline_mode<synchronous>, transform_indices = @transform_2, window_bounds = array<i64: 24, 1>}, {transform_indices = @transform_3, window_bounds = array<i64: 1, 24, 256>}]} {
    %c0 = arith.constant 0 : index
    %c0_0 = arith.constant 0 : index
    %c0_1 = arith.constant 0 : index
    %0 = vector.load %arg2[%c0, %c0_0, %c0_1] : memref<1x16x256xf32, #tpu.memory_space<vmem>>, vector<1x16x256xf32>
    %1 = vector.shape_cast %0 : vector<1x16x256xf32> to vector<16x256xf32>
    %cst = arith.constant 0.000000e+00 : f32
    %2 = vector.broadcast %cst : f32 to vector<16x256xf32>
    %3 = arith.maximumf %1, %2 : vector<16x256xf32>
    %c0_2 = arith.constant 0 : index
    %c0_3 = arith.constant 0 : index
    %4 = vector.load %arg3[%c0_2, %c0_3] : memref<24x16xf32, #tpu.memory_space<vmem>>, vector<24x16xf32>
    %cst_4 = arith.constant dense<0.000000e+00> : vector<24x256xf32>
    %5 = tpu.matmul %4, %3, %cst_4 {dimension_numbers = #tpu.dot_dimension_numbers<[1], [0], [0], [1], [0, 0, 1, 1], [], []>, precision = #tpu.contract_precision<fp32>} : vector<24x16xf32>, vector<16x256xf32>, vector<24x256xf32> -> vector<24x256xf32>
    %c0_5 = arith.constant 0 : index
    %c0_6 = arith.constant 0 : index
    %6 = vector.load %arg4[%c0_5, %c0_6] : memref<24x1xf32, #tpu.memory_space<vmem>>, vector<24x1xf32>
    %7 = vector.broadcast %6 : vector<24x1xf32> to vector<24x256xf32>
    %8 = arith.addf %5, %7 : vector<24x256xf32>
    %c0_7 = arith.constant 0 : index
    %c0_8 = arith.constant 0 : index
    %c0_9 = arith.constant 0 : index
    %9 = vector.load %arg5[%c0_7, %c0_8, %c0_9] : memref<1x24x256xf32, #tpu.memory_space<vmem>>, vector<1x24x256xf32>
    %10 = vector.shape_cast %9 : vector<1x24x256xf32> to vector<24x256xf32>
    %11 = vector.shape_cast %8 : vector<24x256xf32> to vector<1x24x256xf32>
    tpu.vector_store %arg5[%c0_7, %c0_8, %c0_9], %11 {strides = array<i32>} : memref<1x24x256xf32, #tpu.memory_space<vmem>>, vector<1x24x256xf32>,
    return
  }
  func.func @transform_0(%arg0: i32, %arg1: i32) -> (i32, i32, i32) {
    %c0_i32 = arith.constant 0 : i32
    %c0_i32_0 = arith.constant 0 : i32
    return %arg0, %c0_i32, %arg1 : i32, i32, i32
  }
  func.func @transform_1(%arg0: i32, %arg1: i32) -> (i32, i32) {
    %c0_i32 = arith.constant 0 : i32
    %c0_i32_0 = arith.constant 0 : i32
    %c0_i32_1 = arith.constant 0 : i32
    return %c0_i32, %c0_i32_0 : i32, i32
  }
  func.func @transform_2(%arg0: i32, %arg1: i32) -> (i32, i32) {
    %c0_i32 = arith.constant 0 : i32
    %c0_i32_0 = arith.constant 0 : i32
    %c0_i32_1 = arith.constant 0 : i32
    return %c0_i32, %c0_i32_0 : i32, i32
  }
  func.func @transform_3(%arg0: i32, %arg1: i32) -> (i32, i32, i32) {
    %c0_i32 = arith.constant 0 : i32
    %c0_i32_0 = arith.constant 0 : i32
    return %arg0, %c0_i32, %arg1 : i32, i32, i32
  }
}

</mosaic_0001>

<llo_original>
// kernel: factorized_reduce_forward.1
$region0: #{factorized_reduce_forward.1}
  #allocation0 [shape = 'u32[]', space=smem, size = 0x4, offset = 0x4, fixed_abs, tag = 'smem constant byte address 0x4 - core index']
  #allocation1 [shape = 'u32[144,128]{1,0:T(1,128)}', space=vmem, size = 0x12000, scoped, tag = 'internal scratch']
  %s0 = inlined_call_operand.vmem [shape: f32[2,16,256], index: 0, kind: input, shape index: {}]
  %s1 = inlined_call_operand.vmem [shape: f32[24,16], index: 1, kind: input, shape index: {}]
  %s2 = inlined_call_operand.vmem [shape: f32[24,1], index: 2, kind: input, shape index: {}]
  %s3 = inlined_call_operand.vmem [shape: f32[2,24,256], index: 3, kind: output, shape index: {}]
  %s4 = sld [smem:[#allocation0]]
  $region45: #{factorized_reduce_forward.1} parent=0
    _
  %s6 = ssub.s32 1, %s4
  %s7 = scalar_select 0, %s6, %s4
  loop: start=0, step=1, limit=4
  $region2: #{factorized_reduce_forward.1} parent=0 // loop_pre_header
    _
  $region3: #{factorized_reduce_forward.1} parent=0 // loop_header
    %s9 = sphi 0, %s13
    %p10 = scmp.ge.s32.totalorder %s9, 4
    %s16 = sphi 0, %s28
    %s17 = sphi 0, %s24
    %s18 = sphi 0, %s16
    %s19 = sphi 0, %s17
    %s20 = sphi 0, %s18
    %s21 = sphi 0, %s19
    %s33 = sphi 0, %s35
    %s36 = sphi 0, %s33
    %s37 = sphi 0, %s36
    %s53 = sphi 0, %s37
    %s57 = sphi 0, %s57
    %s59 = sphi 0, %s57
    %s60 = sphi 0, %s59
    %s74 = sphi 0, %s60
    %s78 = sphi 0, %s78
    %s80 = sphi 0, %s78
    %s81 = sphi 0, %s80
    %s95 = sphi 0, %s81
    %s103 = sphi 0, %s105
    %s106 = sphi 0, %s103
    %s107 = sphi 0, %s106
    %s123 = sphi 0, %s107
  $region4: #{factorized_reduce_forward.1} parent=0 // loop_header_branch
    %12 = sbr.rel (%p10) target = $region8
  $region5: #{factorized_reduce_forward.1} parent=0 // loop_body
    %s14 = ssub.s32 %s9, 1
    %s15 = ssub.s32 %s9, 2
    %s22 = sadd.s32 1, %s17
    %p23 = scmp.ge.s32.totalorder %s22, 1
    %s24 = scalar_select %p23, 0, %s22
    %s25 = sadd.s32 1, %s16
    %s26 = scalar_select %p23, %s25, %s16
    %p27 = scmp.ge.s32.totalorder %s26, 2
    %s28 = scalar_select %p27, 0, %s26
    %s29 = ssub.s32 %s16, %s28
    %s30 = ssub.s32 %s17, %s24
    %s31 = sor.u32 %s29, %s30
    %p32 = scmp.eq.s32.totalorder %s31, 0
    %s34 = sadd.s32 %s33, 1
    %s35 = scalar_select %p32, %s33, %s34
    %p38 = pneg %p32
    %p39 = scmp.eq.s32.totalorder %s9, 1
    %p40 = por %p38, %p39
    %p41 = scmp.ne.s32.totalorder %s33, %s36
    %p42 = scmp.eq.s32.totalorder %s9, 0
    %p43 = por %p41, %p42
    %p44 = scmp.ne.s32.totalorder %s33, %s36
    %p45 = scmp.eq.s32.totalorder %s14, 1
    %p46 = por %p44, %p45
    %p47 = scmp.ne.s32.totalorder %s36, %s37
    %p48 = scmp.eq.s32.totalorder %s14, 0
    %p49 = por %p47, %p48
    %p50 = scmp.ne.s32.totalorder %s36, %s37
    %p51 = scmp.eq.s32.totalorder %s15, 1
    %p52 = por %p50, %p51
    %p54 = scmp.ne.s32.totalorder %s37, %s53
    %p55 = scmp.eq.s32.totalorder %s15, 0
    %p56 = por %p54, %p55
    %s58 = sadd.s32 %s57, 1
    %p61 = scmp.eq.s32.totalorder %s9, 1
    %p62 = scmp.ne.s32.totalorder %s57, %s59
    %p63 = scmp.eq.s32.totalorder %s9, 0
    %p64 = por %p62, %p63
    %p65 = scmp.ne.s32.totalorder %s57, %s59
    %p66 = scmp.eq.s32.totalorder %s14, 1
    %p67 = por %p65, %p66
    %p68 = scmp.ne.s32.totalorder %s59, %s60
    %p69 = scmp.eq.s32.totalorder %s14, 0
    %p70 = por %p68, %p69
    %p71 = scmp.ne.s32.totalorder %s59, %s60
    %p72 = scmp.eq.s32.totalorder %s15, 1
    %p73 = por %p71, %p72
    %p75 = scmp.ne.s32.totalorder %s60, %s74
    %p76 = scmp.eq.s32.totalorder %s15, 0
    %p77 = por %p75, %p76
    %s79 = sadd.s32 %s78, 1
    %p82 = scmp.eq.s32.totalorder %s9, 1
    %p83 = scmp.ne.s32.totalorder %s78, %s80
    %p84 = scmp.eq.s32.totalorder %s9, 0
    %p85 = por %p83, %p84
    %p86 = scmp.ne.s32.totalorder %s78, %s80
    %p87 = scmp.eq.s32.totalorder %s14, 1
    %p88 = por %p86, %p87
    %p89 = scmp.ne.s32.totalorder %s80, %s81
    %p90 = scmp.eq.s32.totalorder %s14, 0
    %p91 = por %p89, %p90
    %p92 = scmp.ne.s32.totalorder %s80, %s81
    %p93 = scmp.eq.s32.totalorder %s15, 1
    %p94 = por %p92, %p93
    %p96 = scmp.ne.s32.totalorder %s81, %s95
    %p97 = scmp.eq.s32.totalorder %s15, 0
    %p98 = por %p96, %p97
    %s99 = ssub.s32 %s16, %s28
    %s100 = ssub.s32 %s17, %s24
    %s101 = sor.u32 %s99, %s100
    %p102 = scmp.eq.s32.totalorder %s101, 0
    %s104 = sadd.s32 %s103, 1
    %s105 = scalar_select %p102, %s103, %s104
    %p108 = pneg %p102
    %p109 = scmp.eq.s32.totalorder %s9, 1
    %p110 = por %p108, %p109
    %p111 = scmp.ne.s32.totalorder %s103, %s106
    %p112 = scmp.eq.s32.totalorder %s9, 0
    %p113 = por %p111, %p112
    %p114 = scmp.ne.s32.totalorder %s103, %s106
    %p115 = scmp.eq.s32.totalorder %s14, 1
    %p116 = por %p114, %p115
    %p117 = scmp.ne.s32.totalorder %s106, %s107
    %p118 = scmp.eq.s32.totalorder %s14, 0
    %p119 = por %p117, %p118
    %p120 = scmp.ne.s32.totalorder %s106, %s107
    %p121 = scmp.eq.s32.totalorder %s15, 1
    %p122 = por %p120, %p121
    %p124 = scmp.ne.s32.totalorder %s107, %s123
    %p125 = scmp.eq.s32.totalorder %s15, 0
    %p126 = por %p124, %p125
    %p127 = scmp.le.s32.totalorder 1, %s9
    %p128 = scmp.lt.s32.totalorder %s9, 3
    %p129 = pnand %p127, %p128
    %p130 = pneg %p129
    // Predicated region
    $region9: #{factorized_reduce_forward.1} parent=5 // pred_check
      _
    $region10: #{factorized_reduce_forward.1} parent=5 // pred_check_branch
      %132 = sbr.rel (%p129) target = $region12
    $region11: #{factorized_reduce_forward.1} parent=5 // pred_region
      %s133 = ssub.s32 %s9, 1
      // Predicated region
      $region13: #{factorized_reduce_forward.1} parent=11 // pred_check
        %p134 = pneg %p70
      $region14: #{factorized_reduce_forward.1} parent=11 // pred_check_branch
        %136 = sbr.rel (%p134) target = $region16
      $region15: #{factorized_reduce_forward.1} parent=11 // pred_region
        _
      $region16: #{factorized_reduce_forward.1} parent=11 // pred_fallthru
        _
      // Predicated region
      $region17: #{factorized_reduce_forward.1} parent=11 // pred_check
        %p137 = pneg %p91
      $region18: #{factorized_reduce_forward.1} parent=11 // pred_check_branch
        %139 = sbr.rel (%p137) target = $region20
      $region19: #{factorized_reduce_forward.1} parent=11 // pred_region
        _
      $region20: #{factorized_reduce_forward.1} parent=11 // pred_fallthru
        _
    $region12: #{factorized_reduce_forward.1} parent=5 // pred_fallthru
      _
    %p140 = scmp.lt.s32.totalorder %s9, 2
    // Predicated region
    $region21: #{factorized_reduce_forward.1} parent=5 // pred_check
      %p141 = pneg %p140
    $region22: #{factorized_reduce_forward.1} parent=5 // pred_check_branch
      %143 = sbr.rel (%p141) target = $region24
    $region23: #{factorized_reduce_forward.1} parent=5 // pred_region
      // Predicated region
      $region25: #{factorized_reduce_forward.1} parent=23 // pred_check
        %p144 = pneg %p43
      $region26: #{factorized_reduce_forward.1} parent=23 // pred_check_branch
        %146 = sbr.rel (%p144) target = $region28
      $region27: #{factorized_reduce_forward.1} parent=23 // pred_region
        %s147 = smul.u32 2, %s17
        %p148 = scmp.lt.s32.totalorder %s16, 1
        %s149 = scalar_select %p148, %s16, 1
        %p150 = scmp.lt.s32.totalorder %s147, 1
        %s151 = scalar_select %p150, %s147, 1
        %s152 = smul.addr %s149, 4
        %s153 = sadd.s32 %s151, %s152
        %s154 = smul.addr %s153, 8
        %s155 = scalar_lea.vmem %s0, %s154
        %s156 = smul.u32 2, %s17
      $region28: #{factorized_reduce_forward.1} parent=23 // pred_fallthru
        _
    $region24: #{factorized_reduce_forward.1} parent=5 // pred_fallthru
      _
    %p157 = scmp.le.s32.totalorder 1, %s9
    %p158 = scmp.lt.s32.totalorder %s9, 3
    %p159 = pnand %p157, %p158
    %p160 = pneg %p159
    // Predicated region
    $region29: #{factorized_reduce_forward.1} parent=5 // pred_check
      _
    $region30: #{factorized_reduce_forward.1} parent=5 // pred_check_branch
      %162 = sbr.rel (%p159) target = $region32
    $region31: #{factorized_reduce_forward.1} parent=5 // pred_region
      %s163 = ssub.s32 %s9, 1
      %s164 = smul.u32 2, %s19
      %p165 = scmp.lt.s32.totalorder %s18, 1
      %s166 = scalar_select %p165, %s18, 1
      %p167 = scmp.lt.s32.totalorder %s164, 1
      %s168 = scalar_select %p167, %s164, 1
      %s169 = smul.addr %s166, 4
      %s170 = sadd.s32 %s168, %s169
      %s171 = smul.addr %s170, 8
      %s172 = scalar_lea.vmem %s0, %s171
      %p173 = pneg %p49
      %p174 = pneg %p46
      %p175 = pneg %p70
      %p176 = pneg %p67
      %p177 = pneg %p91
      %p178 = pneg %p88
      %p179 = pneg %p119
      %p180 = pneg %p116
      %s181 = smul.u32 2, %s19
      %p182 = scmp.lt.s32.totalorder %s18, 1
      %s183 = scalar_select %p182, %s18, 1
      %p184 = scmp.lt.s32.totalorder %s181, 1
      %s185 = scalar_select %p184, %s181, 1
      %s186 = smul.addr %s183, 6
      %s187 = sadd.s32 %s185, %s186
      %s188 = smul.addr %s187, 8
      %s189 = scalar_lea.vmem %s3, %s188
      %s190 = smul.u32 2, %s19
      %p191 = scmp.lt.s32.totalorder %s18, 1
      %s192 = scalar_select %p191, %s18, 1
      %p193 = scmp.lt.s32.totalorder %s190, 1
      %s194 = scalar_select %p193, %s190, 1
      %s195 = smul.addr %s192, 4
      %s196 = sadd.s32 %s194, %s195
      %s197 = smul.addr %s196, 8
      %s198 = scalar_lea.vmem %s0, %s197
      %s199 = smul.u32 2, %s19
      %s200 = smul.u32 2, %s19
      %p201 = scmp.lt.s32.totalorder %s18, 1
      %s202 = scalar_select %p201, %s18, 1
      %p203 = scmp.lt.s32.totalorder %s200, 1
      %s204 = scalar_select %p203, %s200, 1
      %s205 = smul.addr %s202, 6
      %s206 = sadd.s32 %s204, %s205
      %s207 = smul.addr %s206, 8
      %s208 = scalar_lea.vmem %s3, %s207
      %s209 = smul.u32 2, %s19
      %v210 = vld [vmem:[%s198] sm:$0xff]
      %v211 = vld [vmem:[%s198 + $0x8] sm:$0xff]
      %v212 = vld [vmem:[%s198 + $0x10] sm:$0xff]
      %v213 = vld [vmem:[%s198 + $0x18] sm:$0xff]
      %v214 = vmax.f32 %v210, 0.0
      %v215 = vmax.f32 %v211, 0.0
      %v216 = vmax.f32 %v212, 0.0
      %v217 = vmax.f32 %v213, 0.0
      %v218 = vld [vmem:[%s1] sm:$0xff]
      %v219 = vld [vmem:[%s1 + $0x8] sm:$0xff]
      %v220 = vld [vmem:[%s1 + $0x10] sm:$0xff]
      %v221 = vld [vmem:[%s2] sm:$0xff]
      %v222 = vld [vmem:[%s2 + $0x8] sm:$0xff]
      %v223 = vld [vmem:[%s2 + $0x10] sm:$0xff]
      %225 = vset.pattern.permute.xlu0 0
      %226 = vperm.xlu0 %225, %v221
      %v227 = vpop.permute.xlu0 %226
      %230 = vset.pattern.permute.xlu0 0
      %231 = vperm.xlu0 %230, %v222
      %v232 = vpop.permute.xlu0 %231
      %235 = vset.pattern.permute.xlu0 0
      %236 = vperm.xlu0 %235, %v223
      %v237 = vpop.permute.xlu0 %236
      %vm239 = vcmask 130048
      %v241 = vsel %vm239, %v218, 0
      %v244 = vsel %vm239, %v219, 0
      %v247 = vsel %vm239, %v220, 0
      %v249 = vand.u32 %v215, 4294901760
      %250 = vmatprep.subr.mxu0 %v249
      %v251 = vand.u32 %v214, 4294901760
      %252 = vmatpush1.msra.mxu0 %v251
      %v253 = vand.u32 %v217, 4294901760
      %254 = vmatprep.subr.mxu0 %v253
      %v255 = vand.u32 %v216, 4294901760
      %256 = vmatpush1.msra.mxu0 %v255
      %257 = vmatprep.subr.mxu0 0.0
      %258 = vmatpush1.msra.mxu0 0.0
      %259 = vmatprep.subr.mxu0 0.0
      %260 = vmatpush1.msra.mxu0 0.0
      %261 = vmatprep.subr.mxu0 0.0
      %262 = vmatpush1.msra.mxu0 0.0
      %263 = vmatprep.subr.mxu0 0.0
      %264 = vmatpush1.msra.mxu0 0.0
      %265 = vmatprep.subr.mxu0 0.0
      %266 = vmatpush1.msra.mxu0 0.0
      %267 = vmatprep.subr.mxu0 0.0
      %268 = vmatpush1.msra.mxu0 0.0
      %269 = vmatprep.subr.mxu0 0.0
      %270 = vmatpush1.msra.mxu0 0.0
      %271 = vmatprep.subr.mxu0 0.0
      %272 = vmatpush1.msra.mxu0 0.0
      %273 = vmatprep.subr.mxu0 0.0
      %274 = vmatpush1.msra.mxu0 0.0
      %275 = vmatprep.subr.mxu0 0.0
      %276 = vmatpush1.msra.mxu0 0.0
      %277 = vmatprep.subr.mxu0 0.0
      %278 = vmatpush1.msra.mxu0 0.0
      %279 = vmatprep.subr.mxu0 0.0
      %280 = vmatpush1.msra.mxu0 0.0
      %281 = vmatprep.subr.mxu0 0.0
      %282 = vmatpush1.msra.mxu0 0.0
      %283 = vmatprep.subr.mxu0 0.0
      %284 = vmatpush1.msra.mxu0 0.0
      %285 = vmatprep.subr.mxu0 0.0
      %286 = vmatpush1.msra.mxu0 0.0
      %287 = vmatprep.subr.mxu0 0.0
      %288 = vmatpush1.msra.mxu0 0.0
      %289 = vmatprep.subr.mxu0 0.0
      %290 = vmatpush1.msra.mxu0 0.0
      %291 = vmatprep.subr.mxu0 0.0
      %292 = vmatpush1.msra.mxu0 0.0
      %293 = vmatprep.subr.mxu0 0.0
      %294 = vmatpush1.msra.mxu0 0.0
      %295 = vmatprep.subr.mxu0 0.0
      %296 = vmatpush1.msra.mxu0 0.0
      %297 = vmatprep.subr.mxu0 0.0
      %298 = vmatpush1.msra.mxu0 0.0
      %299 = vmatprep.subr.mxu0 0.0
      %300 = vmatpush1.msra.mxu0 0.0
      %301 = vmatprep.subr.mxu0 0.0
      %302 = vmatpush1.msra.mxu0 0.0
      %303 = vmatprep.subr.mxu0 0.0
      %304 = vmatpush1.msra.mxu0 0.0
      %305 = vmatprep.subr.mxu0 0.0
      %306 = vmatpush1.msra.mxu0 0.0
      %307 = vmatprep.subr.mxu0 0.0
      %308 = vmatpush1.msra.mxu0 0.0
      %309 = vmatprep.subr.mxu0 0.0
      %310 = vmatpush1.msra.mxu0 0.0
      %311 = vmatprep.subr.mxu0 0.0
      %312 = vmatpush1.msra.mxu0 0.0
      %313 = vmatprep.subr.mxu0 0.0
      %314 = vmatpush1.msra.mxu0 0.0
      %315 = vmatprep.subr.mxu0 0.0
      %316 = vmatpush1.msra.mxu0 0.0
      %317 = vmatprep.mubr.f32.mxu0 0.0
      %v318 = vand.u32 %v241, 4294901760
      %v319 = vsub.f32 %v241, %v318
      %v320 = vand.u32 %v319, 4294901760
      %v321 = vsub.f32 %v319, %v320
      %v322 = vand.u32 %v321, 4294901760
      %323 = vmatmul.mubr.f32.gmra.mrb[0].mxu0 %v322
      %v324 = vpop.f32.mrb[0].mxu0
      %v325 = vadd.f32 %v227, %v324
      %v326 = vpop.f32.mrb[0].mxu0
      %v327 = vadd.f32 %v227, %v326
      %328 = vmatprep.mubr.f32.mxu0 0.0
      %v329 = vand.u32 %v244, 4294901760
      %v330 = vsub.f32 %v244, %v329
      %v331 = vand.u32 %v330, 4294901760
      %v332 = vsub.f32 %v330, %v331
      %v333 = vand.u32 %v332, 4294901760
      %334 = vmatmul.mubr.f32.gmra.mrb[0].mxu0 %v333
      %v335 = vpop.f32.mrb[0].mxu0
      %v336 = vadd.f32 %v232, %v335
      %v337 = vpop.f32.mrb[0].mxu0
      %v338 = vadd.f32 %v232, %v337
      %339 = vmatprep.mubr.f32.mxu0 0.0
      %v340 = vand.u32 %v247, 4294901760
      %v341 = vsub.f32 %v247, %v340
      %v342 = vand.u32 %v341, 4294901760
      %v343 = vsub.f32 %v341, %v342
      %v344 = vand.u32 %v343, 4294901760
      %345 = vmatmul.mubr.f32.gmra.mrb[0].mxu0 %v344
      %v346 = vpop.f32.mrb[0].mxu0
      %v347 = vadd.f32 %v237, %v346
      %v348 = vpop.f32.mrb[0].mxu0
      %v349 = vadd.f32 %v237, %v348
      %350 = vdwg.mxu0
      %v351 = vand.u32 %v215, 4294901760
      %v352 = vsub.f32 %v215, %v351
      %v353 = vand.u32 %v352, 4294901760
      %v354 = vsub.f32 %v352, %v353
      %v355 = vand.u32 %v354, 4294901760
      %356 = vmatprep.subr.mxu0 %v355
      %v357 = vand.u32 %v214, 4294901760
      %v358 = vsub.f32 %v214, %v357
      %v359 = vand.u32 %v358, 4294901760
      %v360 = vsub.f32 %v358, %v359
      %v361 = vand.u32 %v360, 4294901760
      %362 = vmatpush1.msra.mxu0 %v361
      %v363 = vand.u32 %v217, 4294901760
      %v364 = vsub.f32 %v217, %v363
      %v365 = vand.u32 %v364, 4294901760
      %v366 = vsub.f32 %v364, %v365
      %v367 = vand.u32 %v366, 4294901760
      %368 = vmatprep.subr.mxu0 %v367
      %v369 = vand.u32 %v216, 4294901760
      %v370 = vsub.f32 %v216, %v369
      %v371 = vand.u32 %v370, 4294901760
      %v372 = vsub.f32 %v370, %v371
      %v373 = vand.u32 %v372, 4294901760
      %374 = vmatpush1.msra.mxu0 %v373
      %375 = vmatprep.subr.mxu0 0.0
      %376 = vmatpush1.msra.mxu0 0.0
      %377 = vmatprep.subr.mxu0 0.0
      %378 = vmatpush1.msra.mxu0 0.0
      %379 = vmatprep.subr.mxu0 0.0
      %380 = vmatpush1.msra.mxu0 0.0
      %381 = vmatprep.subr.mxu0 0.0
      %382 = vmatpush1.msra.mxu0 0.0
      %383 = vmatprep.subr.mxu0 0.0
      %384 = vmatpush1.msra.mxu0 0.0
      %385 = vmatprep.subr.mxu0 0.0
      %386 = vmatpush1.msra.mxu0 0.0
      %387 = vmatprep.subr.mxu0 0.0
      %388 = vmatpush1.msra.mxu0 0.0
      %389 = vmatprep.subr.mxu0 0.0
      %390 = vmatpush1.msra.mxu0 0.0
      %391 = vmatprep.subr.mxu0 0.0
      %392 = vmatpush1.msra.mxu0 0.0
      %393 = vmatprep.subr.mxu0 0.0
      %394 = vmatpush1.msra.mxu0 0.0
      %395 = vmatprep.subr.mxu0 0.0
      %396 = vmatpush1.msra.mxu0 0.0
      %397 = vmatprep.subr.mxu0 0.0
      %398 = vmatpush1.msra.mxu0 0.0
      %399 = vmatprep.subr.mxu0 0.0
      %400 = vmatpush1.msra.mxu0 0.0
      %401 = vmatprep.subr.mxu0 0.0
      %402 = vmatpush1.msra.mxu0 0.0
      %403 = vmatprep.subr.mxu0 0.0
      %404 = vmatpush1.msra.mxu0 0.0
      %405 = vmatprep.subr.mxu0 0.0
      %406 = vmatpush1.msra.mxu0 0.0
      %407 = vmatprep.subr.mxu0 0.0
      %408 = vmatpush1.msra.mxu0 0.0
      %409 = vmatprep.subr.mxu0 0.0
      %410 = vmatpush1.msra.mxu0 0.0
      %411 = vmatprep.subr.mxu0 0.0
      %412 = vmatpush1.msra.mxu0 0.0
      %413 = vmatprep.subr.mxu0 0.0
      %414 = vmatpush1.msra.mxu0 0.0
      %415 = vmatprep.subr.mxu0 0.0
      %416 = vmatpush1.msra.mxu0 0.0
      %417 = vmatprep.subr.mxu0 0.0
      %418 = vmatpush1.msra.mxu0 0.0
      %419 = vmatprep.subr.mxu0 0.0
      %420 = vmatpush1.msra.mxu0 0.0
      %421 = vmatprep.subr.mxu0 0.0
      %422 = vmatpush1.msra.mxu0 0.0
      %423 = vmatprep.subr.mxu0 0.0
      %424 = vmatpush1.msra.mxu0 0.0
      %425 = vmatprep.subr.mxu0 0.0
      %426 = vmatpush1.msra.mxu0 0.0
      %427 = vmatprep.subr.mxu0 0.0
      %428 = vmatpush1.msra.mxu0 0.0
      %429 = vmatprep.subr.mxu0 0.0
      %430 = vmatpush1.msra.mxu0 0.0
      %431 = vmatprep.subr.mxu0 0.0
      %432 = vmatpush1.msra.mxu0 0.0
      %433 = vmatprep.subr.mxu0 0.0
      %434 = vmatpush1.msra.mxu0 0.0
      %435 = vmatprep.mubr.f32.mxu0 0.0
      %v436 = vand.u32 %v241, 4294901760
      %437 = vmatmul.mubr.f32.gmra.mrb[0].mxu0 %v436
      %v438 = vpop.f32.mrb[0].mxu0
      %v439 = vadd.f32 %v325, %v438
      %v440 = vpop.f32.mrb[0].mxu0
      %v441 = vadd.f32 %v327, %v440
      %442 = vmatprep.mubr.f32.mxu0 0.0
      %v443 = vand.u32 %v244, 4294901760
      %444 = vmatmul.mubr.f32.gmra.mrb[0].mxu0 %v443
      %v445 = vpop.f32.mrb[0].mxu0
      %v446 = vadd.f32 %v336, %v445
      %v447 = vpop.f32.mrb[0].mxu0
      %v448 = vadd.f32 %v338, %v447
      %449 = vmatprep.mubr.f32.mxu0 0.0
      %v450 = vand.u32 %v247, 4294901760
      %451 = vmatmul.mubr.f32.gmra.mrb[0].mxu0 %v450
      %v452 = vpop.f32.mrb[0].mxu0
      %v453 = vadd.f32 %v347, %v452
      %v454 = vpop.f32.mrb[0].mxu0
      %v455 = vadd.f32 %v349, %v454
      %456 = vdwg.mxu0
      %v457 = vand.u32 %v215, 4294901760
      %v458 = vsub.f32 %v215, %v457
      %459 = vmatprep.subr.mxu0 %v458
      %v460 = vand.u32 %v214, 4294901760
      %v461 = vsub.f32 %v214, %v460
      %462 = vmatpush1.msra.mxu0 %v461
      %v463 = vand.u32 %v217, 4294901760
      %v464 = vsub.f32 %v217, %v463
      %465 = vmatprep.subr.mxu0 %v464
      %v466 = vand.u32 %v216, 4294901760
      %v467 = vsub.f32 %v216, %v466
      %468 = vmatpush1.msra.mxu0 %v467
      %469 = vmatprep.subr.mxu0 0.0
      %470 = vmatpush1.msra.mxu0 0.0
      %471 = vmatprep.subr.mxu0 0.0
      %472 = vmatpush1.msra.mxu0 0.0
      %473 = vmatprep.subr.mxu0 0.0
      %474 = vmatpush1.msra.mxu0 0.0
      %475 = vmatprep.subr.mxu0 0.0
      %476 = vmatpush1.msra.mxu0 0.0
      %477 = vmatprep.subr.mxu0 0.0
      %478 = vmatpush1.msra.mxu0 0.0
      %479 = vmatprep.subr.mxu0 0.0
      %480 = vmatpush1.msra.mxu0 0.0
      %481 = vmatprep.subr.mxu0 0.0
      %482 = vmatpush1.msra.mxu0 0.0
      %483 = vmatprep.subr.mxu0 0.0
      %484 = vmatpush1.msra.mxu0 0.0
      %485 = vmatprep.subr.mxu0 0.0
      %486 = vmatpush1.msra.mxu0 0.0
      %487 = vmatprep.subr.mxu0 0.0
      %488 = vmatpush1.msra.mxu0 0.0
      %489 = vmatprep.subr.mxu0 0.0
      %490 = vmatpush1.msra.mxu0 0.0
      %491 = vmatprep.subr.mxu0 0.0
      %492 = vmatpush1.msra.mxu0 0.0
      %493 = vmatprep.subr.mxu0 0.0
      %494 = vmatpush1.msra.mxu0 0.0
      %495 = vmatprep.subr.mxu0 0.0
      %496 = vmatpush1.msra.mxu0 0.0
      %497 = vmatprep.subr.mxu0 0.0
      %498 = vmatpush1.msra.mxu0 0.0
      %499 = vmatprep.subr.mxu0 0.0
      %500 = vmatpush1.msra.mxu0 0.0
      %501 = vmatprep.subr.mxu0 0.0
      %502 = vmatpush1.msra.mxu0 0.0
      %503 = vmatprep.subr.mxu0 0.0
      %504 = vmatpush1.msra.mxu0 0.0
      %505 = vmatprep.subr.mxu0 0.0
      %506 = vmatpush1.msra.mxu0 0.0
      %507 = vmatprep.subr.mxu0 0.0
      %508 = vmatpush1.msra.mxu0 0.0
      %509 = vmatprep.subr.mxu0 0.0
      %510 = vmatpush1.msra.mxu0 0.0
      %511 = vmatprep.subr.mxu0 0.0
      %512 = vmatpush1.msra.mxu0 0.0
      %513 = vmatprep.subr.mxu0 0.0
      %514 = vmatpush1.msra.mxu0 0.0
      %515 = vmatprep.subr.mxu0 0.0
      %516 = vmatpush1.msra.mxu0 0.0
      %517 = vmatprep.subr.mxu0 0.0
      %518 = vmatpush1.msra.mxu0 0.0
      %519 = vmatprep.subr.mxu0 0.0
      %520 = vmatpush1.msra.mxu0 0.0
      %521 = vmatprep.subr.mxu0 0.0
      %522 = vmatpush1.msra.mxu0 0.0
      %523 = vmatprep.subr.mxu0 0.0
      %524 = vmatpush1.msra.mxu0 0.0
      %525 = vmatprep.subr.mxu0 0.0
      %526 = vmatpush1.msra.mxu0 0.0
      %527 = vmatprep.subr.mxu0 0.0
      %528 = vmatpush1.msra.mxu0 0.0
      %529 = vmatprep.mubr.f32.mxu0 0.0
      %v530 = vand.u32 %v241, 4294901760
      %v531 = vsub.f32 %v241, %v530
      %532 = vmatmul.mubr.f32.gmra.mrb[0].mxu0 %v531
      %v533 = vpop.f32.mrb[0].mxu0
      %v534 = vadd.f32 %v439, %v533
      %v535 = vpop.f32.mrb[0].mxu0
      %v536 = vadd.f32 %v441, %v535
      %537 = vmatprep.mubr.f32.mxu0 0.0
      %v538 = vand.u32 %v244, 4294901760
      %v539 = vsub.f32 %v244, %v538
      %540 = vmatmul.mubr.f32.gmra.mrb[0].mxu0 %v539
      %v541 = vpop.f32.mrb[0].mxu0
      %v542 = vadd.f32 %v446, %v541
      %v543 = vpop.f32.mrb[0].mxu0
      %v544 = vadd.f32 %v448, %v543
      %545 = vmatprep.mubr.f32.mxu0 0.0
      %v546 = vand.u32 %v247, 4294901760
      %v547 = vsub.f32 %v247, %v546
      %548 = vmatmul.mubr.f32.gmra.mrb[0].mxu0 %v547
      %v549 = vpop.f32.mrb[0].mxu0
      %v550 = vadd.f32 %v453, %v549
      %v551 = vpop.f32.mrb[0].mxu0
      %v552 = vadd.f32 %v455, %v551
      %553 = vdwg.mxu0
      %v554 = vand.u32 %v215, 4294901760
      %555 = vmatprep.subr.mxu0 %v554
      %v556 = vand.u32 %v214, 4294901760
      %557 = vmatpush1.msra.mxu0 %v556
      %v558 = vand.u32 %v217, 4294901760
      %559 = vmatprep.subr.mxu0 %v558
      %v560 = vand.u32 %v216, 4294901760
      %561 = vmatpush1.msra.mxu0 %v560
      %562 = vmatprep.subr.mxu0 0.0
      %563 = vmatpush1.msra.mxu0 0.0
      %564 = vmatprep.subr.mxu0 0.0
      %565 = vmatpush1.msra.mxu0 0.0
      %566 = vmatprep.subr.mxu0 0.0
      %567 = vmatpush1.msra.mxu0 0.0
      %568 = vmatprep.subr.mxu0 0.0
      %569 = vmatpush1.msra.mxu0 0.0
      %570 = vmatprep.subr.mxu0 0.0
      %571 = vmatpush1.msra.mxu0 0.0
      %572 = vmatprep.subr.mxu0 0.0
      %573 = vmatpush1.msra.mxu0 0.0
      %574 = vmatprep.subr.mxu0 0.0
      %575 = vmatpush1.msra.mxu0 0.0
      %576 = vmatprep.subr.mxu0 0.0
      %577 = vmatpush1.msra.mxu0 0.0
      %578 = vmatprep.subr.mxu0 0.0
      %579 = vmatpush1.msra.mxu0 0.0
      %580 = vmatprep.subr.mxu0 0.0
      %581 = vmatpush1.msra.mxu0 0.0
      %582 = vmatprep.subr.mxu0 0.0
      %583 = vmatpush1.msra.mxu0 0.0
      %584 = vmatprep.subr.mxu0 0.0
      %585 = vmatpush1.msra.mxu0 0.0
      %586 = vmatprep.subr.mxu0 0.0
      %587 = vmatpush1.msra.mxu0 0.0
      %588 = vmatprep.subr.mxu0 0.0
      %589 = vmatpush1.msra.mxu0 0.0
      %590 = vmatprep.subr.mxu0 0.0
      %591 = vmatpush1.msra.mxu0 0.0
      %592 = vmatprep.subr.mxu0 0.0
      %593 = vmatpush1.msra.mxu0 0.0
      %594 = vmatprep.subr.mxu0 0.0
      %595 = vmatpush1.msra.mxu0 0.0
      %596 = vmatprep.subr.mxu0 0.0
      %597 = vmatpush1.msra.mxu0 0.0
      %598 = vmatprep.subr.mxu0 0.0
      %599 = vmatpush1.msra.mxu0 0.0
      %600 = vmatprep.subr.mxu0 0.0
      %601 = vmatpush1.msra.mxu0 0.0
      %602 = vmatprep.subr.mxu0 0.0
      %603 = vmatpush1.msra.mxu0 0.0
      %604 = vmatprep.subr.mxu0 0.0
      %605 = vmatpush1.msra.mxu0 0.0
      %606 = vmatprep.subr.mxu0 0.0
      %607 = vmatpush1.msra.mxu0 0.0
      %608 = vmatprep.subr.mxu0 0.0
      %609 = vmatpush1.msra.mxu0 0.0
      %610 = vmatprep.subr.mxu0 0.0
      %611 = vmatpush1.msra.mxu0 0.0
      %612 = vmatprep.subr.mxu0 0.0
      %613 = vmatpush1.msra.mxu0 0.0
      %614 = vmatprep.subr.mxu0 0.0
      %615 = vmatpush1.msra.mxu0 0.0
      %616 = vmatprep.subr.mxu0 0.0
      %617 = vmatpush1.msra.mxu0 0.0
      %618 = vmatprep.subr.mxu0 0.0
      %619 = vmatpush1.msra.mxu0 0.0
      %620 = vmatprep.subr.mxu0 0.0
      %621 = vmatpush1.msra.mxu0 0.0
      %622 = vmatprep.mubr.f32.mxu0 0.0
      %v623 = vand.u32 %v241, 4294901760
      %v624 = vsub.f32 %v241, %v623
      %v625 = vand.u32 %v624, 4294901760
      %626 = vmatmul.mubr.f32.gmra.mrb[0].mxu0 %v625
      %v627 = vpop.f32.mrb[0].mxu0
      %v628 = vadd.f32 %v534, %v627
      %v629 = vpop.f32.mrb[0].mxu0
      %v630 = vadd.f32 %v536, %v629
      %631 = vmatprep.mubr.f32.mxu0 0.0
      %v632 = vand.u32 %v244, 4294901760
      %v633 = vsub.f32 %v244, %v632
      %v634 = vand.u32 %v633, 4294901760
      %635 = vmatmul.mubr.f32.gmra.mrb[0].mxu0 %v634
      %v636 = vpop.f32.mrb[0].mxu0
      %v637 = vadd.f32 %v542, %v636
      %v638 = vpop.f32.mrb[0].mxu0
      %v639 = vadd.f32 %v544, %v638
      %640 = vmatprep.mubr.f32.mxu0 0.0
      %v641 = vand.u32 %v247, 4294901760
      %v642 = vsub.f32 %v247, %v641
      %v643 = vand.u32 %v642, 4294901760
      %644 = vmatmul.mubr.f32.gmra.mrb[0].mxu0 %v643
      %v645 = vpop.f32.mrb[0].mxu0
      %v646 = vadd.f32 %v550, %v645
      %v647 = vpop.f32.mrb[0].mxu0
      %v648 = vadd.f32 %v552, %v647
      %649 = vdwg.mxu0
      %v650 = vand.u32 %v215, 4294901760
      %v651 = vsub.f32 %v215, %v650
      %v652 = vand.u32 %v651, 4294901760
      %653 = vmatprep.subr.mxu0 %v652
      %v654 = vand.u32 %v214, 4294901760
      %v655 = vsub.f32 %v214, %v654
      %v656 = vand.u32 %v655, 4294901760
      %657 = vmatpush1.msra.mxu0 %v656
      %v658 = vand.u32 %v217, 4294901760
      %v659 = vsub.f32 %v217, %v658
      %v660 = vand.u32 %v659, 4294901760
      %661 = vmatprep.subr.mxu0 %v660
      %v662 = vand.u32 %v216, 4294901760
      %v663 = vsub.f32 %v216, %v662
      %v664 = vand.u32 %v663, 4294901760
      %665 = vmatpush1.msra.mxu0 %v664
      %666 = vmatprep.subr.mxu0 0.0
      %667 = vmatpush1.msra.mxu0 0.0
      %668 = vmatprep.subr.mxu0 0.0
      %669 = vmatpush1.msra.mxu0 0.0
      %670 = vmatprep.subr.mxu0 0.0
      %671 = vmatpush1.msra.mxu0 0.0
      %672 = vmatprep.subr.mxu0 0.0
      %673 = vmatpush1.msra.mxu0 0.0
      %674 = vmatprep.subr.mxu0 0.0
      %675 = vmatpush1.msra.mxu0 0.0
      %676 = vmatprep.subr.mxu0 0.0
      %677 = vmatpush1.msra.mxu0 0.0
      %678 = vmatprep.subr.mxu0 0.0
      %679 = vmatpush1.msra.mxu0 0.0
      %680 = vmatprep.subr.mxu0 0.0
      %681 = vmatpush1.msra.mxu0 0.0
      %682 = vmatprep.subr.mxu0 0.0
      %683 = vmatpush1.msra.mxu0 0.0
      %684 = vmatprep.subr.mxu0 0.0
      %685 = vmatpush1.msra.mxu0 0.0
      %686 = vmatprep.subr.mxu0 0.0
      %687 = vmatpush1.msra.mxu0 0.0
      %688 = vmatprep.subr.mxu0 0.0
      %689 = vmatpush1.msra.mxu0 0.0
      %690 = vmatprep.subr.mxu0 0.0
      %691 = vmatpush1.msra.mxu0 0.0
      %692 = vmatprep.subr.mxu0 0.0
      %693 = vmatpush1.msra.mxu0 0.0
      %694 = vmatprep.subr.mxu0 0.0
      %695 = vmatpush1.msra.mxu0 0.0
      %696 = vmatprep.subr.mxu0 0.0
      %697 = vmatpush1.msra.mxu0 0.0
      %698 = vmatprep.subr.mxu0 0.0
      %699 = vmatpush1.msra.mxu0 0.0
      %700 = vmatprep.subr.mxu0 0.0
      %701 = vmatpush1.msra.mxu0 0.0
      %702 = vmatprep.subr.mxu0 0.0
      %703 = vmatpush1.msra.mxu0 0.0
      %704 = vmatprep.subr.mxu0 0.0
      %705 = vmatpush1.msra.mxu0 0.0
      %706 = vmatprep.subr.mxu0 0.0
      %707 = vmatpush1.msra.mxu0 0.0
      %708 = vmatprep.subr.mxu0 0.0
      %709 = vmatpush1.msra.mxu0 0.0
      %710 = vmatprep.subr.mxu0 0.0
      %711 = vmatpush1.msra.mxu0 0.0
      %712 = vmatprep.subr.mxu0 0.0
      %713 = vmatpush1.msra.mxu0 0.0
      %714 = vmatprep.subr.mxu0 0.0
      %715 = vmatpush1.msra.mxu0 0.0
      %716 = vmatprep.subr.mxu0 0.0
      %717 = vmatpush1.msra.mxu0 0.0
      %718 = vmatprep.subr.mxu0 0.0
      %719 = vmatpush1.msra.mxu0 0.0
      %720 = vmatprep.subr.mxu0 0.0
      %721 = vmatpush1.msra.mxu0 0.0
      %722 = vmatprep.subr.mxu0 0.0
      %723 = vmatpush1.msra.mxu0 0.0
      %724 = vmatprep.subr.mxu0 0.0
      %725 = vmatpush1.msra.mxu0 0.0
      %726 = vmatprep.mubr.f32.mxu0 0.0
      %v727 = vand.u32 %v241, 4294901760
      %728 = vmatmul.mubr.f32.gmra.mrb[0].mxu0 %v727
      %v729 = vpop.f32.mrb[0].mxu0
      %v730 = vadd.f32 %v628, %v729
      %v731 = vpop.f32.mrb[0].mxu0
      %v732 = vadd.f32 %v630, %v731
      %733 = vmatprep.mubr.f32.mxu0 0.0
      %v734 = vand.u32 %v244, 4294901760
      %735 = vmatmul.mubr.f32.gmra.mrb[0].mxu0 %v734
      %v736 = vpop.f32.mrb[0].mxu0
      %v737 = vadd.f32 %v637, %v736
      %v738 = vpop.f32.mrb[0].mxu0
      %v739 = vadd.f32 %v639, %v738
      %740 = vmatprep.mubr.f32.mxu0 0.0
      %v741 = vand.u32 %v247, 4294901760
      %742 = vmatmul.mubr.f32.gmra.mrb[0].mxu0 %v741
      %v743 = vpop.f32.mrb[0].mxu0
      %v744 = vadd.f32 %v646, %v743
      %v745 = vpop.f32.mrb[0].mxu0
      %v746 = vadd.f32 %v648, %v745
      %747 = vdwg.mxu0
      %v748 = vand.u32 %v215, 4294901760
      %749 = vmatprep.subr.mxu0 %v748
      %v750 = vand.u32 %v214, 4294901760
      %751 = vmatpush1.msra.mxu0 %v750
      %v752 = vand.u32 %v217, 4294901760
      %753 = vmatprep.subr.mxu0 %v752
      %v754 = vand.u32 %v216, 4294901760
      %755 = vmatpush1.msra.mxu0 %v754
      %756 = vmatprep.subr.mxu0 0.0
      %757 = vmatpush1.msra.mxu0 0.0
      %758 = vmatprep.subr.mxu0 0.0
      %759 = vmatpush1.msra.mxu0 0.0
      %760 = vmatprep.subr.mxu0 0.0
      %761 = vmatpush1.msra.mxu0 0.0
      %762 = vmatprep.subr.mxu0 0.0
      %763 = vmatpush1.msra.mxu0 0.0
      %764 = vmatprep.subr.mxu0 0.0
      %765 = vmatpush1.msra.mxu0 0.0
      %766 = vmatprep.subr.mxu0 0.0
      %767 = vmatpush1.msra.mxu0 0.0
      %768 = vmatprep.subr.mxu0 0.0
      %769 = vmatpush1.msra.mxu0 0.0
      %770 = vmatprep.subr.mxu0 0.0
      %771 = vmatpush1.msra.mxu0 0.0
      %772 = vmatprep.subr.mxu0 0.0
      %773 = vmatpush1.msra.mxu0 0.0
      %774 = vmatprep.subr.mxu0 0.0
      %775 = vmatpush1.msra.mxu0 0.0
      %776 = vmatprep.subr.mxu0 0.0
      %777 = vmatpush1.msra.mxu0 0.0
      %778 = vmatprep.subr.mxu0 0.0
      %779 = vmatpush1.msra.mxu0 0.0
      %780 = vmatprep.subr.mxu0 0.0
      %781 = vmatpush1.msra.mxu0 0.0
      %782 = vmatprep.subr.mxu0 0.0
      %783 = vmatpush1.msra.mxu0 0.0
      %784 = vmatprep.subr.mxu0 0.0
      %785 = vmatpush1.msra.mxu0 0.0
      %786 = vmatprep.subr.mxu0 0.0
      %787 = vmatpush1.msra.mxu0 0.0
      %788 = vmatprep.subr.mxu0 0.0
      %789 = vmatpush1.msra.mxu0 0.0
      %790 = vmatprep.subr.mxu0 0.0
      %791 = vmatpush1.msra.mxu0 0.0
      %792 = vmatprep.subr.mxu0 0.0
      %793 = vmatpush1.msra.mxu0 0.0
      %794 = vmatprep.subr.mxu0 0.0
      %795 = vmatpush1.msra.mxu0 0.0
      %796 = vmatprep.subr.mxu0 0.0
      %797 = vmatpush1.msra.mxu0 0.0
      %798 = vmatprep.subr.mxu0 0.0
      %799 = vmatpush1.msra.mxu0 0.0
      %800 = vmatprep.subr.mxu0 0.0
      %801 = vmatpush1.msra.mxu0 0.0
      %802 = vmatprep.subr.mxu0 0.0
      %803 = vmatpush1.msra.mxu0 0.0
      %804 = vmatprep.subr.mxu0 0.0
      %805 = vmatpush1.msra.mxu0 0.0
      %806 = vmatprep.subr.mxu0 0.0
      %807 = vmatpush1.msra.mxu0 0.0
      %808 = vmatprep.subr.mxu0 0.0
      %809 = vmatpush1.msra.mxu0 0.0
      %810 = vmatprep.subr.mxu0 0.0
      %811 = vmatpush1.msra.mxu0 0.0
      %812 = vmatprep.subr.mxu0 0.0
      %813 = vmatpush1.msra.mxu0 0.0
      %814 = vmatprep.subr.mxu0 0.0
      %815 = vmatpush1.msra.mxu0 0.0
      %816 = vmatprep.mubr.f32.mxu0 0.0
      %v817 = vand.u32 %v241, 4294901760
      %818 = vmatmul.mubr.f32.gmra.mrb[0].mxu0 %v817
      %v819 = vpop.f32.mrb[0].mxu0
      %v820 = vadd.f32 %v730, %v819
      %v821 = vpop.f32.mrb[0].mxu0
      %v822 = vadd.f32 %v732, %v821
      %823 = vmatprep.mubr.f32.mxu0 0.0
      %v824 = vand.u32 %v244, 4294901760
      %825 = vmatmul.mubr.f32.gmra.mrb[0].mxu0 %v824
      %v826 = vpop.f32.mrb[0].mxu0
      %v827 = vadd.f32 %v737, %v826
      %v828 = vpop.f32.mrb[0].mxu0
      %v829 = vadd.f32 %v739, %v828
      %830 = vmatprep.mubr.f32.mxu0 0.0
      %v831 = vand.u32 %v247, 4294901760
      %832 = vmatmul.mubr.f32.gmra.mrb[0].mxu0 %v831
      %v833 = vpop.f32.mrb[0].mxu0
      %v834 = vadd.f32 %v744, %v833
      %v835 = vpop.f32.mrb[0].mxu0
      %v836 = vadd.f32 %v746, %v835
      %837 = vdwg.mxu0
      %838 = vst [vmem:[%s208] sm:$0xff] %v820
      %839 = vst [vmem:[%s208 + $0x8] sm:$0xff] %v822
      %840 = vst [vmem:[%s208 + $0x10] sm:$0xff] %v827
      %841 = vst [vmem:[%s208 + $0x18] sm:$0xff] %v829
      %842 = vst [vmem:[%s208 + $0x20] sm:$0xff] %v834
      %843 = vst [vmem:[%s208 + $0x28] sm:$0xff] %v836
      %s844 = smul.u32 2, %s19
      %p845 = scmp.lt.s32.totalorder %s18, 1
      %s846 = scalar_select %p845, %s18, 1
      %p847 = scmp.lt.s32.totalorder %s844, 1
      %s848 = scalar_select %p847, %s844, 1
      %s849 = smul.addr %s846, 6
      %s850 = sadd.s32 %s848, %s849
      %s851 = smul.addr %s850, 8
      %s852 = scalar_lea.vmem %s3, %s851
      // Predicated region
      $region33: #{factorized_reduce_forward.1} parent=31 // pred_check
        %p853 = pneg %p116
      $region34: #{factorized_reduce_forward.1} parent=31 // pred_check_branch
        %855 = sbr.rel (%p853) target = $region36
      $region35: #{factorized_reduce_forward.1} parent=31 // pred_region
        %s856 = smul.u32 2, %s19
      $region36: #{factorized_reduce_forward.1} parent=31 // pred_fallthru
        _
    $region32: #{factorized_reduce_forward.1} parent=5 // pred_fallthru
      _
    %p857 = scmp.le.s32.totalorder 2, %s9
    // Predicated region
    $region37: #{factorized_reduce_forward.1} parent=5 // pred_check
      %p858 = pneg %p857
    $region38: #{factorized_reduce_forward.1} parent=5 // pred_check_branch
      %860 = sbr.rel (%p858) target = $region40
    $region39: #{factorized_reduce_forward.1} parent=5 // pred_region
      %s861 = ssub.s32 %s9, 2
      // Predicated region
      $region41: #{factorized_reduce_forward.1} parent=39 // pred_check
        %p862 = pneg %p122
      $region42: #{factorized_reduce_forward.1} parent=39 // pred_check_branch
        %864 = sbr.rel (%p862) target = $region44
      $region43: #{factorized_reduce_forward.1} parent=39 // pred_region
        %s865 = smul.u32 2, %s21
        %p866 = scmp.lt.s32.totalorder %s20, 1
        %s867 = scalar_select %p866, %s20, 1
        %p868 = scmp.lt.s32.totalorder %s865, 1
        %s869 = scalar_select %p868, %s865, 1
        %s870 = smul.addr %s867, 6
        %s871 = sadd.s32 %s869, %s870
        %s872 = smul.addr %s871, 8
        %s873 = scalar_lea.vmem %s3, %s872
      $region44: #{factorized_reduce_forward.1} parent=39 // pred_fallthru
        _
    $region40: #{factorized_reduce_forward.1} parent=5 // pred_fallthru
      _
  $region6: #{factorized_reduce_forward.1} parent=0 // loop_footer
    %s13 = sadd.s32 1, %s9
  $region7: #{factorized_reduce_forward.1} parent=0 // loop_footer_branch
    %8 = sbr.rel target = $region3
  $region8: #{factorized_reduce_forward.1} parent=0 // loop_exit
    _

</llo_original>
